<compile_context>
chip_gen: v5e
topology: v5e:2x2
jax: 0.10.0
libtpu: 0.0.40
codegen_flags: <defaults>
</compile_context>

<pallas_src>
import functools
from typing import Any, NamedTuple, Tuple

import jax
import jax.numpy as jnp
from jax.experimental import pallas as pl
from jax.experimental.pallas import tpu as pltpu

BN_EPS = 1e-5
LANES = 128


def _round_up(n, m):
    return ((n + m - 1) // m) * m


# --------------------------------------------------------------------------- kernel
def dnn_kernel(x_ref, *refs, n_valid_rows, act_dtype):
    """refs = [W0, g0, beta0, W1, g1, beta1, ..., W_out, b_out, out_ref].

    x_ref already holds the padded input in the matmul dtype.  Padded feature
    lanes are zero (weights / gamma / beta zero-padded) and padded batch rows are
    zero on entry; both are kept exactly zero / masked out of the BatchNorm
    statistics, so the valid region equals the unpadded computation.
    """
    out_ref = refs[-1]
    param_refs = refs[:-1]
    n_hidden = (len(param_refs) - 2) // 3

    h = x_ref[...]                         # matmul dtype (bf16 by default), no cast
    n_rows = h.shape[0]
    inv_n = 1.0 / n_valid_rows
    need_row_mask = n_rows != n_valid_rows

    for i in range(n_hidden):
        w, g, beta = param_refs[3 * i: 3 * i + 3]
        # Linear.  Hidden bias dropped (exactly cancelled by BN mean subtraction).
        # f32 MXU accumulation; padded rows / lanes of h32 come out exactly zero.
        h32 = jnp.dot(h, w[...], preferred_element_type=jnp.float32)

        # BatchNorm1d, training-mode batch statistics (biased variance), two-pass /
        # centered to avoid E[h^2]-E[h]^2 cancellation.  Padded rows of h32 are
        # zero, so the raw sum over all rows divided by n_valid gives the exact mean.
        mean = jnp.sum(h32, axis=0, keepdims=True) * inv_n
        c = h32 - mean
        if need_row_mask:
            row_mask = jax.lax.broadcasted_iota(jnp.int32, c.shape, 0) < n_valid_rows
            c_stat = jnp.where(row_mask, c, 0.0)
        else:
            c_stat = c
        var = jnp.sum(c_stat * c_stat, axis=0, keepdims=True) * inv_n
        scale = g[...] * jax.lax.rsqrt(var + BN_EPS)           # rsqrt on EUP

        # Fused normalize + affine + ReLU, emitted directly in the matmul dtype so
        # the next layer's matmul needs no cast and the live activation halves.
        a = jnp.maximum(c * scale + beta[...], 0.0)
        if need_row_mask:
            a = jnp.where(row_mask, a, 0.0)     # keep padded rows exactly zero
        h = a.astype(act_dtype)
        # TODO(synk): Dropout is stochastic in torch training mode; eval-mode
        # identity here (would use pltpu.prng_seed / pltpu.prng_random_bits).

    w_out, b_out = param_refs[-2], param_refs[-1]
    out = jnp.dot(h, w_out[...], preferred_element_type=jnp.float32) + b_out[...]
    out_ref[...] = out.astype(out_ref.dtype)


# ----------------------------------------------------------------- one-time param prep
class PreparedDNN(NamedTuple):
    flat: Tuple            # padded / pre-cast device arrays, in kernel arg order
    in_dim: int
    in_dim_p: int
    out_dim: int
    out_dim_p: int
    max_dim_p: int
    sum_kd_p: int          # sum over layers of padded K*D (for the cost estimate)
    hidden_dims_p: int     # sum of padded hidden dims (one rsqrt per feature)
    matmul_dtype: Any


def prepare_params(hidden_params, out_params, *, use_bf16_matmul=True):
    """Pad feature dims to multiples of 128 and cast weights to the matmul dtype ONCE.

    hidden_params: list of (W, b, gamma, beta); out_params: (W, b).  W is
    (in_dim, out_dim); b / gamma / beta are (1, dim).  Hidden-layer biases are
    accepted for API parity but dropped (BatchNorm's mean subtraction cancels
    them exactly).  Call once and reuse across forward passes — re-padding /
    re-casting the whole parameter set per call roughly doubles HBM traffic in
    the weight-DMA-bound regime.
    """
    matmul_dtype = jnp.bfloat16 if use_bf16_matmul else jnp.float32
    in_dim = hidden_params[0][0].shape[0] if hidden_params else out_params[0].shape[0]
    in_dim_p = _round_up(in_dim, LANES)

    flat = []
    dims_p = [in_dim_p]
    sum_kd_p = 0
    hidden_dims_p = 0
    prev, prev_p = in_dim, in_dim_p
    for (w, _b, g, beta) in hidden_params:       # hidden bias intentionally dropped
        d = w.shape[1]
        d_p = _round_up(d, LANES)
        w_p = jnp.pad(w.astype(jnp.float32),
                      ((0, prev_p - prev), (0, d_p - d))).astype(matmul_dtype)
        g_p = jnp.pad(g.astype(jnp.float32), ((0, 0), (0, d_p - d)))
        beta_p = jnp.pad(beta.astype(jnp.float32), ((0, 0), (0, d_p - d)))
        flat += [w_p, g_p, beta_p]
        sum_kd_p += prev_p * d_p
        hidden_dims_p += d_p
        dims_p.append(d_p)
        prev, prev_p = d, d_p

    w_o, b_o = out_params
    out_dim = w_o.shape[1]
    out_dim_p = _round_up(out_dim, LANES)
    w_o_p = jnp.pad(w_o.astype(jnp.float32),
                    ((0, prev_p - prev), (0, out_dim_p - out_dim))).astype(matmul_dtype)
    b_o_p = jnp.pad(b_o.astype(jnp.float32), ((0, 0), (0, out_dim_p - out_dim)))
    flat += [w_o_p, b_o_p]
    sum_kd_p += prev_p * out_dim_p
    dims_p.append(out_dim_p)

    flat = tuple(flat)
    jax.block_until_ready(flat)          # materialize the one-time pad/cast now

    return PreparedDNN(
        flat=flat, in_dim=in_dim, in_dim_p=in_dim_p, out_dim=out_dim,
        out_dim_p=out_dim_p, max_dim_p=max(dims_p), sum_kd_p=sum_kd_p,
        hidden_dims_p=hidden_dims_p, matmul_dtype=matmul_dtype)


# -------------------------------------------------------------------------- forward
def dnn_forward(x, prepared: PreparedDNN):
    """Run the DNN forward.  `prepared` comes from prepare_params()."""
    n_batch, in_dim = x.shape
    assert in_dim == prepared.in_dim, (in_dim, prepared.in_dim)
    md = prepared.matmul_dtype

    # Sublane packing: bf16 vregs pack (16, 128) — pad the batch so the MXU LHS is
    # fed full packed vregs.  Padded rows are masked inside the kernel.
    sub = 16 if md == jnp.bfloat16 else 8
    n_p = _round_up(n_batch, sub)
    x_p = jnp.pad(x.astype(md),
                  ((0, n_p - n_batch), (0, prepared.in_dim_p - in_dim)))

    # ---- generation-aware VMEM budget + cost estimate ------------------------
    param_bytes = sum(int(a.size) * a.dtype.itemsize for a in prepared.flat)
    io_bytes = int(x_p.size) * x_p.dtype.itemsize + n_p * prepared.out_dim_p * 4
    # live per-layer activations: f32 matmul result + centered copy + ReLU output
    # + next-layer matmul-dtype activation.
    act_bytes = n_p * prepared.max_dim_p * (4 + 4 + 4 + jnp.dtype(md).itemsize)
    needed = param_bytes + io_bytes + act_bytes + (4 << 20)

    try:
        vmem_cap = int(pltpu.get_tpu_info().vmem_capacity_bytes)
    except Exception:
        vmem_cap = 64 << 20        # v7x per-TC VMEM: smallest across generations
    budget = vmem_cap - (8 << 20)  # headroom for Mosaic-internal scratch
    if needed > budget:
        # TODO(synk): batch-tiled grid (cross-tile two-pass BN stats accumulated in
        # VMEM scratch on an "arbitrary" axis) plus per-layer double-buffered weight
        # streaming (memory_space=pl.ANY + pltpu.make_async_copy) for configs that
        # exceed a single core's VMEM; unnecessary at these shapes.
        raise ValueError(
            f"DNN does not fit single-shot in VMEM: needs ~{needed >> 20} MiB, "
            f"budget {budget >> 20} MiB on this TPU generation.")
    vmem_limit = int(min(max(needed, 32 << 20), budget))

    cost = pl.CostEstimate(
        flops=int(2 * n_p * prepared.sum_kd_p),
        transcendentals=int(prepared.hidden_dims_p),
        bytes_accessed=int(param_bytes + io_bytes),
    )

    kernel = functools.partial(dnn_kernel, n_valid_rows=n_batch, act_dtype=md)
    n_inputs = 1 + len(prepared.flat)

    out_p = pl.pallas_call(
        kernel,
        out_shape=jax.ShapeDtypeStruct((n_p, prepared.out_dim_p), jnp.float32),
        in_specs=[pl.BlockSpec(memory_space=pltpu.MemorySpace.VMEM)] * n_inputs,
        out_specs=pl.BlockSpec(memory_space=pltpu.MemorySpace.VMEM),
        compiler_params=pltpu.CompilerParams(vmem_limit_bytes=vmem_limit),
        cost_estimate=cost,
    )(x_p, *prepared.flat)
    return out_p[:n_batch, :prepared.out_dim]


# ------------------------------------------------------------------------ params/init
def init_params(key, input_dim, n_hid_nodes, output_dim):
    """Mirror DNN.weights_init: kaiming_normal_(fan_in, relu) weights, N(0, .01) bias."""
    dims = [input_dim] + list(n_hid_nodes) + [output_dim]
    hidden_params = []
    out_params = None
    for i in range(len(dims) - 1):
        fan_in, fan_out = dims[i], dims[i + 1]
        key, kw, kb = jax.random.split(key, 3)
        std = (2.0 / fan_in) ** 0.5  # kaiming normal, mode='fan_in', relu gain
        w = std * jax.random.normal(kw, (fan_in, fan_out), dtype=jnp.float32)
        b = 0.01 * jax.random.normal(kb, (1, fan_out), dtype=jnp.float32)
        if i < len(dims) - 2:
            gamma = jnp.ones((1, fan_out), dtype=jnp.float32)
            beta = jnp.zeros((1, fan_out), dtype=jnp.float32)
            hidden_params.append((w, b, gamma, beta))
        else:
            out_params = (w, b)
    return hidden_params, out_params


# ------------------------------------------------------------------------- references
def dnn_reference_torch(x, hidden_params, out_params):
    """Plain-JAX f32 reference with exact torch-module semantics (training-mode BN)."""
    h = x.astype(jnp.float32)
    for (w, b, g, beta) in hidden_params:
        h = h @ w + b
        mean = jnp.mean(h, axis=0, keepdims=True)
        var = jnp.mean((h - mean) ** 2, axis=0, keepdims=True)
        h = (h - mean) * jax.lax.rsqrt(var + BN_EPS)
        h = h * g + beta
        h = jnp.maximum(h, 0.0)
    return h @ out_params[0] + out_params[1]


def dnn_reference_matched(x, hidden_params, out_params, *, use_bf16_matmul=True):
    """Mirrors the kernel's arithmetic (no hidden bias, centered BN, matmul-dtype acts)."""
    md = jnp.bfloat16 if use_bf16_matmul else jnp.float32
    h = x.astype(md)
    inv_n = 1.0 / x.shape[0]
    for (w, _b, g, beta) in hidden_params:
        h32 = jnp.dot(h, w.astype(md), preferred_element_type=jnp.float32)
        mean = jnp.sum(h32, axis=0, keepdims=True) * inv_n
        c = h32 - mean
        var = jnp.sum(c * c, axis=0, keepdims=True) * inv_n
        scale = g * jax.lax.rsqrt(var + BN_EPS)
        h = jnp.maximum(c * scale + beta, 0.0).astype(md)
    w_o, b_o = out_params
    return jnp.dot(h, w_o.astype(md), preferred_element_type=jnp.float32) + b_o


# -------------------------------------------------------------------------------- main
if __name__ == "__main__":
    # Small shapes consistent with the module's forward (x: (batch, input_dim)).
    batch = 8
    input_dim = 16
    n_hid_nodes = [32, 32]
    output_dim = 4

    key = jax.random.PRNGKey(0)
    key, kx = jax.random.split(key)
    x = jax.random.normal(kx, (batch, input_dim), dtype=jnp.float32)

    hidden_params, out_params = init_params(key, input_dim, n_hid_nodes, output_dim)

    # 1) f32-MXU path: check against the torch-semantics f32 reference.
    prep_f32 = prepare_params(hidden_params, out_params, use_bf16_matmul=False)
    out_f32 = jax.block_until_ready(dnn_forward(x, prep_f32))
    ref_f32 = dnn_reference_torch(x, hidden_params, out_params)
    assert out_f32.shape == (batch, output_dim)
    assert jnp.allclose(out_f32, ref_f32, atol=1e-4, rtol=1e-4), "f32 mismatch vs reference"

    # 2) bf16-MXU path (default perf config): parameters padded/cast ONCE and reused
    #    across calls; check against a matched reference and loosely against f32.
    prep_bf16 = prepare_params(hidden_params, out_params, use_bf16_matmul=True)
    out = jax.block_until_ready(dnn_forward(x, prep_bf16))
    out2 = jax.block_until_ready(dnn_forward(x, prep_bf16))   # reuse of prepared params
    ref_m = dnn_reference_matched(x, hidden_params, out_params, use_bf16_matmul=True)
    assert out.shape == (batch, output_dim)
    assert jnp.allclose(out, ref_m, atol=5e-3, rtol=5e-3), "bf16 mismatch vs matched reference"
    assert jnp.allclose(out, out2), "result not reproducible across calls"
    assert jnp.allclose(out, ref_f32, atol=1e-1, rtol=1e-1), "bf16 output far from f32 reference"

    print("KERNEL_OK")
</pallas_src>

<mosaic_0001>
module attributes {stable_mosaic.version = 11 : i64} {
  func.func @dnn_kernel(%arg0: memref<8x128xf32, #tpu.memory_space<vmem>>, %arg1: memref<128x128xf32, #tpu.memory_space<vmem>>, %arg2: memref<1x128xf32, #tpu.memory_space<vmem>>, %arg3: memref<1x128xf32, #tpu.memory_space<vmem>>, %arg4: memref<128x128xf32, #tpu.memory_space<vmem>>, %arg5: memref<1x128xf32, #tpu.memory_space<vmem>>, %arg6: memref<1x128xf32, #tpu.memory_space<vmem>>, %arg7: memref<128x128xf32, #tpu.memory_space<vmem>>, %arg8: memref<1x128xf32, #tpu.memory_space<vmem>>, %arg9: memref<8x128xf32, #tpu.memory_space<vmem>>) attributes {dimension_semantics = [], scalar_prefetch = 0 : i64, scratch_operands = 0 : i64, tpu.core_type = #tpu.core_type<tc>} {
    %c0 = arith.constant 0 : index
    %c0_0 = arith.constant 0 : index
    %0 = vector.load %arg0[%c0, %c0_0] : memref<8x128xf32, #tpu.memory_space<vmem>>, vector<8x128xf32>
    %c0_1 = arith.constant 0 : index
    %c0_2 = arith.constant 0 : index
    %1 = vector.load %arg1[%c0_1, %c0_2] : memref<128x128xf32, #tpu.memory_space<vmem>>, vector<128x128xf32>
    %cst = arith.constant dense<0.000000e+00> : vector<8x128xf32>
    %2 = tpu.matmul %0, %1, %cst {dimension_numbers = #tpu.dot_dimension_numbers<[1], [0], [0], [1], [0, 0, 1, 1], [], []>} : vector<8x128xf32>, vector<128x128xf32>, vector<8x128xf32> -> vector<8x128xf32>
    %cst_3 = arith.constant dense<0.000000e+00> : vector<128xf32>
    %3 = vector.multi_reduction <add>, %2, %cst_3 [0] : vector<8x128xf32> to vector<128xf32>
    %4 = vector.shape_cast %3 : vector<128xf32> to vector<1x128xf32>
    %cst_4 = arith.constant 1.250000e-01 : f32
    %5 = vector.broadcast %cst_4 : f32 to vector<1x128xf32>
    %6 = arith.mulf %4, %5 : vector<1x128xf32>
    %7 = vector.broadcast %6 : vector<1x128xf32> to vector<8x128xf32>
    %8 = arith.subf %2, %7 : vector<8x128xf32>
    %9 = arith.mulf %8, %8 : vector<8x128xf32>
    %cst_5 = arith.constant dense<0.000000e+00> : vector<128xf32>
    %10 = vector.multi_reduction <add>, %9, %cst_5 [0] : vector<8x128xf32> to vector<128xf32>
    %11 = vector.shape_cast %10 : vector<128xf32> to vector<1x128xf32>
    %cst_6 = arith.constant 1.250000e-01 : f32
    %12 = vector.broadcast %cst_6 : f32 to vector<1x128xf32>
    %13 = arith.mulf %11, %12 : vector<1x128xf32>
    %c0_7 = arith.constant 0 : index
    %c0_8 = arith.constant 0 : index
    %14 = vector.load %arg2[%c0_7, %c0_8] : memref<1x128xf32, #tpu.memory_space<vmem>>, vector<1x128xf32>
    %cst_9 = arith.constant 9.99999974E-6 : f32
    %15 = vector.broadcast %cst_9 : f32 to vector<1x128xf32>
    %16 = arith.addf %13, %15 : vector<1x128xf32>
    %17 = math.rsqrt %16 : vector<1x128xf32>
    %18 = arith.mulf %14, %17 : vector<1x128xf32>
    %19 = vector.broadcast %18 : vector<1x128xf32> to vector<8x128xf32>
    %20 = arith.mulf %8, %19 : vector<8x128xf32>
    %c0_10 = arith.constant 0 : index
    %c0_11 = arith.constant 0 : index
    %21 = vector.load %arg3[%c0_10, %c0_11] : memref<1x128xf32, #tpu.memory_space<vmem>>, vector<1x128xf32>
    %22 = vector.broadcast %21 : vector<1x128xf32> to vector<8x128xf32>
    %23 = arith.addf %20, %22 : vector<8x128xf32>
    %cst_12 = arith.constant 0.000000e+00 : f32
    %24 = vector.broadcast %cst_12 : f32 to vector<8x128xf32>
    %25 = arith.maximumf %23, %24 : vector<8x128xf32>
    %c0_13 = arith.constant 0 : index
    %c0_14 = arith.constant 0 : index
    %26 = vector.load %arg4[%c0_13, %c0_14] : memref<128x128xf32, #tpu.memory_space<vmem>>, vector<128x128xf32>
    %cst_15 = arith.constant dense<0.000000e+00> : vector<8x128xf32>
    %27 = tpu.matmul %25, %26, %cst_15 {dimension_numbers = #tpu.dot_dimension_numbers<[1], [0], [0], [1], [0, 0, 1, 1], [], []>} : vector<8x128xf32>, vector<128x128xf32>, vector<8x128xf32> -> vector<8x128xf32>
    %cst_16 = arith.constant dense<0.000000e+00> : vector<128xf32>
    %28 = vector.multi_reduction <add>, %27, %cst_16 [0] : vector<8x128xf32> to vector<128xf32>
    %29 = vector.shape_cast %28 : vector<128xf32> to vector<1x128xf32>
    %cst_17 = arith.constant 1.250000e-01 : f32
    %30 = vector.broadcast %cst_17 : f32 to vector<1x128xf32>
    %31 = arith.mulf %29, %30 : vector<1x128xf32>
    %32 = vector.broadcast %31 : vector<1x128xf32> to vector<8x128xf32>
    %33 = arith.subf %27, %32 : vector<8x128xf32>
    %34 = arith.mulf %33, %33 : vector<8x128xf32>
    %cst_18 = arith.constant dense<0.000000e+00> : vector<128xf32>
    %35 = vector.multi_reduction <add>, %34, %cst_18 [0] : vector<8x128xf32> to vector<128xf32>
    %36 = vector.shape_cast %35 : vector<128xf32> to vector<1x128xf32>
    %cst_19 = arith.constant 1.250000e-01 : f32
    %37 = vector.broadcast %cst_19 : f32 to vector<1x128xf32>
    %38 = arith.mulf %36, %37 : vector<1x128xf32>
    %c0_20 = arith.constant 0 : index
    %c0_21 = arith.constant 0 : index
    %39 = vector.load %arg5[%c0_20, %c0_21] : memref<1x128xf32, #tpu.memory_space<vmem>>, vector<1x128xf32>
    %cst_22 = arith.constant 9.99999974E-6 : f32
    %40 = vector.broadcast %cst_22 : f32 to vector<1x128xf32>
    %41 = arith.addf %38, %40 : vector<1x128xf32>
    %42 = math.rsqrt %41 : vector<1x128xf32>
    %43 = arith.mulf %39, %42 : vector<1x128xf32>
    %44 = vector.broadcast %43 : vector<1x128xf32> to vector<8x128xf32>
    %45 = arith.mulf %33, %44 : vector<8x128xf32>
    %c0_23 = arith.constant 0 : index
    %c0_24 = arith.constant 0 : index
    %46 = vector.load %arg6[%c0_23, %c0_24] : memref<1x128xf32, #tpu.memory_space<vmem>>, vector<1x128xf32>
    %47 = vector.broadcast %46 : vector<1x128xf32> to vector<8x128xf32>
    %48 = arith.addf %45, %47 : vector<8x128xf32>
    %cst_25 = arith.constant 0.000000e+00 : f32
    %49 = vector.broadcast %cst_25 : f32 to vector<8x128xf32>
    %50 = arith.maximumf %48, %49 : vector<8x128xf32>
    %c0_26 = arith.constant 0 : index
    %c0_27 = arith.constant 0 : index
    %51 = vector.load %arg7[%c0_26, %c0_27] : memref<128x128xf32, #tpu.memory_space<vmem>>, vector<128x128xf32>
    %cst_28 = arith.constant dense<0.000000e+00> : vector<8x128xf32>
    %52 = tpu.matmul %50, %51, %cst_28 {dimension_numbers = #tpu.dot_dimension_numbers<[1], [0], [0], [1], [0, 0, 1, 1], [], []>} : vector<8x128xf32>, vector<128x128xf32>, vector<8x128xf32> -> vector<8x128xf32>
    %c0_29 = arith.constant 0 : index
    %c0_30 = arith.constant 0 : index
    %53 = vector.load %arg8[%c0_29, %c0_30] : memref<1x128xf32, #tpu.memory_space<vmem>>, vector<1x128xf32>
    %54 = vector.broadcast %53 : vector<1x128xf32> to vector<8x128xf32>
    %55 = arith.addf %52, %54 : vector<8x128xf32>
    %c0_31 = arith.constant 0 : index
    %c0_32 = arith.constant 0 : index
    %56 = vector.load %arg9[%c0_31, %c0_32] : memref<8x128xf32, #tpu.memory_space<vmem>>, vector<8x128xf32>
    tpu.vector_store %arg9[%c0_31, %c0_32], %55 {strides = array<i32>} : memref<8x128xf32, #tpu.memory_space<vmem>>, vector<8x128xf32>,
    return
  }
}

</mosaic_0001>

<llo_original>
// kernel: tpu_custom_call.1
$region0: #{tpu_custom_call.1}
  #allocation0 [shape = 'u32[]', space=smem, size = 0x4, offset = 0x4, fixed_abs, tag = 'smem constant byte address 0x4 - core index']
  #allocation1 [shape = 'u32[72,128]{1,0:T(1,128)}', space=vmem, size = 0x9000, scoped, tag = 'internal scratch']
  %s0 = inlined_call_operand.hbm [shape: f32[8,128], index: 0, kind: input, shape index: {}]
  %s1 = inlined_call_operand.hbm [shape: f32[128,128], index: 1, kind: input, shape index: {}]
  %s2 = inlined_call_operand.vmem [shape: f32[1,128], index: 2, kind: input, shape index: {}]
  %s3 = inlined_call_operand.vmem [shape: f32[1,128], index: 3, kind: input, shape index: {}]
  %s4 = inlined_call_operand.hbm [shape: f32[128,128], index: 4, kind: input, shape index: {}]
  %s5 = inlined_call_operand.vmem [shape: f32[1,128], index: 5, kind: input, shape index: {}]
  %s6 = inlined_call_operand.vmem [shape: f32[1,128], index: 6, kind: input, shape index: {}]
  %s7 = inlined_call_operand.hbm [shape: f32[128,128], index: 7, kind: input, shape index: {}]
  %s8 = inlined_call_operand.vmem [shape: f32[1,128], index: 8, kind: input, shape index: {}]
  %s9 = inlined_call_operand.hbm [shape: f32[8,128], index: 9, kind: output, shape index: {}]
  %s10 = sld [smem:[#allocation0]]
  $region62: #{tpu_custom_call.1} parent=0
    _
  %s12 = ssub.s32 1, %s10
  %s13 = scalar_select 0, %s12, %s10
  $region1: #{tpu_custom_call.1} parent=0
    #allocation2 [shape = 'u8[4096]{0}', space=vmem, size = 0x1000, scoped, tag = 'input window, operand 0, single buffered']
    #allocation3 [shape = 's32[1]{0}', space=sflag, size = 0x4, scoped, tag = 'scoped memory for tpu_custom_call.1']
    #allocation4 [shape = 's32[1]{0}', space=sflag, size = 0x4, scoped, tag = 'scoped memory for tpu_custom_call.1']
    #allocation5 [shape = 'u8[65536]{0}', space=vmem, size = 0x10000, scoped, tag = 'input window, operand 1, single buffered']
    #allocation6 [shape = 's32[1]{0}', space=sflag, size = 0x4, scoped, tag = 'scoped memory for tpu_custom_call.1']
    #allocation7 [shape = 'u8[65536]{0}', space=vmem, size = 0x10000, scoped, tag = 'input window, operand 4, single buffered']
    #allocation8 [shape = 'u8[65536]{0}', space=vmem, size = 0x10000, scoped, tag = 'input window, operand 7, single buffered']
    #allocation9 [shape = 's32[1]{0}', space=sflag, size = 0x4, scoped, tag = 'scoped memory for tpu_custom_call.1']
    #allocation10 [shape = 'u8[4096]{0}', space=vmem, size = 0x1000, scoped, tag = 'output window, operand 0, single buffered']
    %14 = vsyncpa [#allocation3], 0
    %15 = vsyncpa [#allocation6], 0
    %16 = vsyncpa [#allocation9], 0
    %17 = vsyncpa [#allocation4], 0
    // Predicated region
    $region2: #{tpu_custom_call.1} parent=1 // pred_check
      _
    $region3: #{tpu_custom_call.1} parent=1 // pred_check_branch
      %19 = sbr.rel (0) target = $region5
    $region4: #{tpu_custom_call.1} parent=1 // pred_region
      %21 = vsyncadd [#allocation3], 0
      %s23 = sshll.u32 %s0, 4
      %s24 = int_to_ptr.hbm [resolvable:$true] %s23
      %s25 = sshll.u32 [#allocation2], 4
      %s26 = int_to_ptr.vmem [resolvable:$true] %s25
      %28 = dma.hbm_to_vmem [thread:$0]  %s24, 128, %s26, [#allocation3]
    $region5: #{tpu_custom_call.1} parent=1 // pred_fallthru
      _
    // Predicated region
    $region6: #{tpu_custom_call.1} parent=1 // pred_check
      _
    $region7: #{tpu_custom_call.1} parent=1 // pred_check_branch
      %30 = sbr.rel (0) target = $region9
    $region8: #{tpu_custom_call.1} parent=1 // pred_region
      %32 = vsyncadd [#allocation6], 0
      %s33 = sshll.u32 %s1, 4
      %s34 = int_to_ptr.hbm [resolvable:$true] %s33
      %s35 = sshll.u32 [#allocation5], 4
      %s36 = int_to_ptr.vmem [resolvable:$true] %s35
      %41 = dma.hbm_to_vmem [thread:$0]  %s34, 2048, %s36, [#allocation6], 128, 128, 8
    $region9: #{tpu_custom_call.1} parent=1 // pred_fallthru
      _
    // Predicated region
    $region10: #{tpu_custom_call.1} parent=1 // pred_check
      _
    $region11: #{tpu_custom_call.1} parent=1 // pred_check_branch
      %43 = sbr.rel (0) target = $region13
    $region12: #{tpu_custom_call.1} parent=1 // pred_region
      _
    $region13: #{tpu_custom_call.1} parent=1 // pred_fallthru
      _
    // Predicated region
    $region14: #{tpu_custom_call.1} parent=1 // pred_check
      _
    $region15: #{tpu_custom_call.1} parent=1 // pred_check_branch
      %45 = sbr.rel (0) target = $region17
    $region16: #{tpu_custom_call.1} parent=1 // pred_region
      _
    $region17: #{tpu_custom_call.1} parent=1 // pred_fallthru
      _
    // Predicated region
    $region18: #{tpu_custom_call.1} parent=1 // pred_check
      _
    $region19: #{tpu_custom_call.1} parent=1 // pred_check_branch
      %47 = sbr.rel (0) target = $region21
    $region20: #{tpu_custom_call.1} parent=1 // pred_region
      %49 = vsyncadd [#allocation6], 0
      %s50 = sshll.u32 %s4, 4
      %s51 = int_to_ptr.hbm [resolvable:$true] %s50
      %s52 = sshll.u32 [#allocation7], 4
      %s53 = int_to_ptr.vmem [resolvable:$true] %s52
      %58 = dma.hbm_to_vmem [thread:$0]  %s51, 2048, %s53, [#allocation6], 128, 128, 8
    $region21: #{tpu_custom_call.1} parent=1 // pred_fallthru
      _
    // Predicated region
    $region22: #{tpu_custom_call.1} parent=1 // pred_check
      _
    $region23: #{tpu_custom_call.1} parent=1 // pred_check_branch
      %60 = sbr.rel (0) target = $region25
    $region24: #{tpu_custom_call.1} parent=1 // pred_region
      _
    $region25: #{tpu_custom_call.1} parent=1 // pred_fallthru
      _
    // Predicated region
    $region26: #{tpu_custom_call.1} parent=1 // pred_check
      _
    $region27: #{tpu_custom_call.1} parent=1 // pred_check_branch
      %62 = sbr.rel (0) target = $region29
    $region28: #{tpu_custom_call.1} parent=1 // pred_region
      _
    $region29: #{tpu_custom_call.1} parent=1 // pred_fallthru
      _
    // Predicated region
    $region30: #{tpu_custom_call.1} parent=1 // pred_check
      _
    $region31: #{tpu_custom_call.1} parent=1 // pred_check_branch
      %64 = sbr.rel (0) target = $region33
    $region32: #{tpu_custom_call.1} parent=1 // pred_region
      %66 = vsyncadd [#allocation9], 0
      %s67 = sshll.u32 %s7, 4
      %s68 = int_to_ptr.hbm [resolvable:$true] %s67
      %s69 = sshll.u32 [#allocation8], 4
      %s70 = int_to_ptr.vmem [resolvable:$true] %s69
      %75 = dma.hbm_to_vmem [thread:$0]  %s68, 2048, %s70, [#allocation9], 128, 128, 8
    $region33: #{tpu_custom_call.1} parent=1 // pred_fallthru
      _
    // Predicated region
    $region34: #{tpu_custom_call.1} parent=1 // pred_check
      _
    $region35: #{tpu_custom_call.1} parent=1 // pred_check_branch
      %77 = sbr.rel (0) target = $region37
    $region36: #{tpu_custom_call.1} parent=1 // pred_region
      _
    $region37: #{tpu_custom_call.1} parent=1 // pred_fallthru
      _
    // Predicated region
    $region38: #{tpu_custom_call.1} parent=1 // pred_check
      _
    $region39: #{tpu_custom_call.1} parent=1 // pred_check_branch
      %79 = sbr.rel (0) target = $region41
    $region40: #{tpu_custom_call.1} parent=1 // pred_region
      %81 = dma.done [#allocation3], 128
    $region41: #{tpu_custom_call.1} parent=1 // pred_fallthru
      _
    // Predicated region
    $region42: #{tpu_custom_call.1} parent=1 // pred_check
      _
    $region43: #{tpu_custom_call.1} parent=1 // pred_check_branch
      %83 = sbr.rel (0) target = $region45
    $region44: #{tpu_custom_call.1} parent=1 // pred_region
      %85 = dma.done [#allocation6], 2048
    $region45: #{tpu_custom_call.1} parent=1 // pred_fallthru
      _
    // Predicated region
    $region46: #{tpu_custom_call.1} parent=1 // pred_check
      _
    $region47: #{tpu_custom_call.1} parent=1 // pred_check_branch
      %87 = sbr.rel (0) target = $region49
    $region48: #{tpu_custom_call.1} parent=1 // pred_region
      %89 = dma.done [#allocation6], 2048
    $region49: #{tpu_custom_call.1} parent=1 // pred_fallthru
      _
    // Predicated region
    $region50: #{tpu_custom_call.1} parent=1 // pred_check
      _
    $region51: #{tpu_custom_call.1} parent=1 // pred_check_branch
      %91 = sbr.rel (0) target = $region53
    $region52: #{tpu_custom_call.1} parent=1 // pred_region
      %93 = dma.done [#allocation9], 2048
    $region53: #{tpu_custom_call.1} parent=1 // pred_fallthru
      _
    %v94 = vld [vmem:[#allocation2] sm:$0xff]
    %v95 = vld [vmem:[#allocation5] sm:$0xff]
    %v96 = vld [vmem:[#allocation5 + $0x8] sm:$0xff]
    %v97 = vld [vmem:[#allocation5 + $0x10] sm:$0xff]
    %v98 = vld [vmem:[#allocation5 + $0x18] sm:$0xff]
    %v99 = vld [vmem:[#allocation5 + $0x20] sm:$0xff]
    %v100 = vld [vmem:[#allocation5 + $0x28] sm:$0xff]
    %v101 = vld [vmem:[#allocation5 + $0x30] sm:$0xff]
    %v102 = vld [vmem:[#allocation5 + $0x38] sm:$0xff]
    %v103 = vld [vmem:[#allocation5 + $0x40] sm:$0xff]
    %v104 = vld [vmem:[#allocation5 + $0x48] sm:$0xff]
    %v105 = vld [vmem:[#allocation5 + $0x50] sm:$0xff]
    %v106 = vld [vmem:[#allocation5 + $0x58] sm:$0xff]
    %v107 = vld [vmem:[#allocation5 + $0x60] sm:$0xff]
    %v108 = vld [vmem:[#allocation5 + $0x68] sm:$0xff]
    %v109 = vld [vmem:[#allocation5 + $0x70] sm:$0xff]
    %v110 = vld [vmem:[#allocation5 + $0x78] sm:$0xff]
    %111 = vmatpush.msra.mxu0 %v110
    %112 = vmatpush.msra.mxu0 %v109
    %113 = vmatpush.msra.mxu0 %v108
    %114 = vmatpush.msra.mxu0 %v107
    %115 = vmatpush.msra.mxu0 %v106
    %116 = vmatpush.msra.mxu0 %v105
    %117 = vmatpush.msra.mxu0 %v104
    %118 = vmatpush.msra.mxu0 %v103
    %119 = vmatpush.msra.mxu0 %v102
    %120 = vmatpush.msra.mxu0 %v101
    %121 = vmatpush.msra.mxu0 %v100
    %122 = vmatpush.msra.mxu0 %v99
    %123 = vmatpush.msra.mxu0 %v98
    %124 = vmatpush.msra.mxu0 %v97
    %125 = vmatpush.msra.mxu0 %v96
    %126 = vmatpush.msra.mxu0 %v95
    %127 = vmatmul.f32.gmra.mxu0 %v94
    %v128 = vpop.f32.mrf.mxu0
    %v129 = vadd.f32 0.0, %v128
    %130 = vdwg.mxu0
    %v131 = vrot.slane %v129, 4
    %v132 = vadd.f32 %v129, %v131
    %v133 = vrot.slane %v132, 2
    %v134 = vadd.f32 %v132, %v133
    %v135 = vrot.slane %v134, 1
    %v136 = vadd.f32 %v134, %v135
    %v137 = vmul.f32 %v136, 0.125
    %v138 = vsub.f32 %v129, %v137
    %v139 = vmul.f32 %v138, %v138
    %v140 = vrot.slane %v139, 4
    %v141 = vadd.f32 %v139, %v140
    %v142 = vrot.slane %v141, 2
    %v143 = vadd.f32 %v141, %v142
    %v144 = vrot.slane %v143, 1
    %v145 = vadd.f32 %v143, %v144
    %v146 = vmul.f32 %v145, 0.125
    %v147 = vld [vmem:[%s2] sm:$0x1]
    %v148 = vadd.f32 %v146, 1e-05
    %v149 = vrsqrt.pop %v148
    %v150 = vmul.f32 %v149, %v148
    %v151 = vmul.f32 %v150, %v149
    %v152 = vmul.f32 0.5, %v151
    %v153 = vsub.f32 1.5, %v152
    %v154 = vmul.f32 %v149, %v153
    %vm155 = vweird.f32 %v148
    %vm156 = vweird.f32 %v149
    %vm157 = vmor %vm155, %vm156
    %v158 = vsel %vm157, %v149, %v154
    %v159 = vmul.f32 %v147, %v158
    %v161 = vperm.slane %v159, 0
    %v163 = vmul.f32 %v138, %v161
    %v164 = vld [vmem:[%s3] sm:$0x1]
    %v166 = vperm.slane %v164, 0
    %v168 = vadd.f32 %v163, %v166
    %v169 = vmax.f32 %v168, 0.0
    %v170 = vld [vmem:[#allocation7] sm:$0xff]
    %v171 = vld [vmem:[#allocation7 + $0x8] sm:$0xff]
    %v172 = vld [vmem:[#allocation7 + $0x10] sm:$0xff]
    %v173 = vld [vmem:[#allocation7 + $0x18] sm:$0xff]
    %v174 = vld [vmem:[#allocation7 + $0x20] sm:$0xff]
    %v175 = vld [vmem:[#allocation7 + $0x28] sm:$0xff]
    %v176 = vld [vmem:[#allocation7 + $0x30] sm:$0xff]
    %v177 = vld [vmem:[#allocation7 + $0x38] sm:$0xff]
    %v178 = vld [vmem:[#allocation7 + $0x40] sm:$0xff]
    %v179 = vld [vmem:[#allocation7 + $0x48] sm:$0xff]
    %v180 = vld [vmem:[#allocation7 + $0x50] sm:$0xff]
    %v181 = vld [vmem:[#allocation7 + $0x58] sm:$0xff]
    %v182 = vld [vmem:[#allocation7 + $0x60] sm:$0xff]
    %v183 = vld [vmem:[#allocation7 + $0x68] sm:$0xff]
    %v184 = vld [vmem:[#allocation7 + $0x70] sm:$0xff]
    %v185 = vld [vmem:[#allocation7 + $0x78] sm:$0xff]
    %186 = vmatpush.msra.mxu0 %v185
    %187 = vmatpush.msra.mxu0 %v184
    %188 = vmatpush.msra.mxu0 %v183
    %189 = vmatpush.msra.mxu0 %v182
    %190 = vmatpush.msra.mxu0 %v181
    %191 = vmatpush.msra.mxu0 %v180
    %192 = vmatpush.msra.mxu0 %v179
    %193 = vmatpush.msra.mxu0 %v178
    %194 = vmatpush.msra.mxu0 %v177
    %195 = vmatpush.msra.mxu0 %v176
    %196 = vmatpush.msra.mxu0 %v175
    %197 = vmatpush.msra.mxu0 %v174
    %198 = vmatpush.msra.mxu0 %v173
    %199 = vmatpush.msra.mxu0 %v172
    %200 = vmatpush.msra.mxu0 %v171
    %201 = vmatpush.msra.mxu0 %v170
    %202 = vmatmul.f32.gmra.mxu0 %v169
    %v203 = vpop.f32.mrf.mxu0
    %v204 = vadd.f32 0.0, %v203
    %205 = vdwg.mxu0
    %v206 = vrot.slane %v204, 4
    %v207 = vadd.f32 %v204, %v206
    %v208 = vrot.slane %v207, 2
    %v209 = vadd.f32 %v207, %v208
    %v210 = vrot.slane %v209, 1
    %v211 = vadd.f32 %v209, %v210
    %v212 = vmul.f32 %v211, 0.125
    %v213 = vsub.f32 %v204, %v212
    %v214 = vmul.f32 %v213, %v213
    %v215 = vrot.slane %v214, 4
    %v216 = vadd.f32 %v214, %v215
    %v217 = vrot.slane %v216, 2
    %v218 = vadd.f32 %v216, %v217
    %v219 = vrot.slane %v218, 1
    %v220 = vadd.f32 %v218, %v219
    %v221 = vmul.f32 %v220, 0.125
    %v222 = vld [vmem:[%s5] sm:$0x1]
    %v223 = vadd.f32 %v221, 1e-05
    %v224 = vrsqrt.pop %v223
    %v225 = vmul.f32 %v224, %v223
    %v226 = vmul.f32 %v225, %v224
    %v227 = vmul.f32 0.5, %v226
    %v228 = vsub.f32 1.5, %v227
    %v229 = vmul.f32 %v224, %v228
    %vm230 = vweird.f32 %v223
    %vm231 = vweird.f32 %v224
    %vm232 = vmor %vm230, %vm231
    %v233 = vsel %vm232, %v224, %v229
    %v234 = vmul.f32 %v222, %v233
    %v236 = vperm.slane %v234, 0
    %v238 = vmul.f32 %v213, %v236
    %v239 = vld [vmem:[%s6] sm:$0x1]
    %v241 = vperm.slane %v239, 0
    %v243 = vadd.f32 %v238, %v241
    %v244 = vmax.f32 %v243, 0.0
    %v245 = vld [vmem:[#allocation8] sm:$0xff]
    %v246 = vld [vmem:[#allocation8 + $0x8] sm:$0xff]
    %v247 = vld [vmem:[#allocation8 + $0x10] sm:$0xff]
    %v248 = vld [vmem:[#allocation8 + $0x18] sm:$0xff]
    %v249 = vld [vmem:[#allocation8 + $0x20] sm:$0xff]
    %v250 = vld [vmem:[#allocation8 + $0x28] sm:$0xff]
    %v251 = vld [vmem:[#allocation8 + $0x30] sm:$0xff]
    %v252 = vld [vmem:[#allocation8 + $0x38] sm:$0xff]
    %v253 = vld [vmem:[#allocation8 + $0x40] sm:$0xff]
    %v254 = vld [vmem:[#allocation8 + $0x48] sm:$0xff]
    %v255 = vld [vmem:[#allocation8 + $0x50] sm:$0xff]
    %v256 = vld [vmem:[#allocation8 + $0x58] sm:$0xff]
    %v257 = vld [vmem:[#allocation8 + $0x60] sm:$0xff]
    %v258 = vld [vmem:[#allocation8 + $0x68] sm:$0xff]
    %v259 = vld [vmem:[#allocation8 + $0x70] sm:$0xff]
    %v260 = vld [vmem:[#allocation8 + $0x78] sm:$0xff]
    %v261 = vld [vmem:[%s8] sm:$0x1]
    %v263 = vperm.slane %v261, 0
    %265 = vmatpush.msra.mxu0 %v260
    %266 = vmatpush.msra.mxu0 %v259
    %267 = vmatpush.msra.mxu0 %v258
    %268 = vmatpush.msra.mxu0 %v257
    %269 = vmatpush.msra.mxu0 %v256
    %270 = vmatpush.msra.mxu0 %v255
    %271 = vmatpush.msra.mxu0 %v254
    %272 = vmatpush.msra.mxu0 %v253
    %273 = vmatpush.msra.mxu0 %v252
    %274 = vmatpush.msra.mxu0 %v251
    %275 = vmatpush.msra.mxu0 %v250
    %276 = vmatpush.msra.mxu0 %v249
    %277 = vmatpush.msra.mxu0 %v248
    %278 = vmatpush.msra.mxu0 %v247
    %279 = vmatpush.msra.mxu0 %v246
    %280 = vmatpush.msra.mxu0 %v245
    %281 = vmatmul.f32.gmra.mxu0 %v244
    %v282 = vpop.f32.mrf.mxu0
    %v283 = vadd.f32 %v263, %v282
    %284 = vdwg.mxu0
    %285 = vst [vmem:[#allocation10] sm:$0xff] %v283
    // Predicated region
    $region54: #{tpu_custom_call.1} parent=1 // pred_check
      _
    $region55: #{tpu_custom_call.1} parent=1 // pred_check_branch
      %287 = sbr.rel (0) target = $region57
    $region56: #{tpu_custom_call.1} parent=1 // pred_region
      %289 = vsyncadd [#allocation4], 0
      %s291 = sshll.u32 [#allocation10], 4
      %s292 = int_to_ptr.vmem [resolvable:$true] %s291
      %s293 = sshll.u32 %s9, 4
      %s294 = int_to_ptr.hbm [resolvable:$true] %s293
      %296 = dma.vmem_to_hbm [thread:$0]  %s292, 128, %s294, [#allocation4]
    $region57: #{tpu_custom_call.1} parent=1 // pred_fallthru
      _
    // Predicated region
    $region58: #{tpu_custom_call.1} parent=1 // pred_check
      _
    $region59: #{tpu_custom_call.1} parent=1 // pred_check_branch
      %298 = sbr.rel (0) target = $region61
    $region60: #{tpu_custom_call.1} parent=1 // pred_region
      %300 = dma.done [#allocation4], 128
    $region61: #{tpu_custom_call.1} parent=1 // pred_fallthru
      _
    %301 = vsyncpa [#allocation3], 1
    %302 = vsyncpa [#allocation6], 1
    %303 = vsyncpa [#allocation9], 1
    %304 = vsyncpa [#allocation4], 1

</llo_original>
